<compile_context>
chip_gen: v6e
topology: v6e:2x2x1
jax: 0.10.0
libtpu: 0.0.40
codegen_flags: <defaults>
</compile_context>

<pallas_src>
import functools

import jax
import jax.numpy as jnp
import numpy as np
from jax import lax
from jax.experimental import pallas as pl
from jax.experimental.pallas import tpu as pltpu


def _round_up(x, m):
    return ((x + m - 1) // m) * m


def _make_supcon_kernel(*, temperature, base_temperature, n_anchor, n_contrast,
                        tm, nc_pad, use_codes):
    inv_t = float(1.0 / temperature)
    loss_scale = float(-(temperature / base_temperature))
    inv_n_anchor = float(1.0 / n_anchor)

    def kernel(*refs):
        if use_codes:
            row_codes_ref, col_codes_ref, contrast_ref, out_ref, acc_ref = refs
        else:
            mask_ref, contrast_ref, out_ref, acc_ref = refs

        step = pl.program_id(0)

        @pl.when(step == 0)
        def _init():
            acc_ref[...] = jnp.zeros_like(acc_ref)

        row_start = pl.multiple_of(step * tm, tm)

        c = contrast_ref[...]                           # [NCp, Dp] bf16, resident
        a = contrast_ref[pl.ds(row_start, tm), :]       # [TM, Dp] bf16 anchor rows

        # logits = (A @ C^T) / temperature  -- contract last dims (no transpose),
        # bf16 inputs with f32 accumulation on the MXU.
        logits = lax.dot_general(
            a, c, dimension_numbers=(((1,), (1,)), ((), ())),
            preferred_element_type=jnp.float32) * inv_t         # [TM, NCp] f32

        col_idx = lax.broadcasted_iota(jnp.int32, (tm, nc_pad), 1)
        row_idx = step * tm + lax.broadcasted_iota(jnp.int32, (tm, nc_pad), 0)
        col_valid = col_idx < n_contrast
        not_diag = row_idx != col_idx
        keep = jnp.logical_and(col_valid, not_diag)

        neg = jnp.float32(-1e30)
        # Padded contrast columns never contribute (not even to the row max;
        # the real row max *does* include the self column, matching torch).
        logits = jnp.where(col_valid, logits, neg)
        logits = logits - jnp.max(logits, axis=1, keepdims=True)

        # Log-space self-exclusion for the log-sum-exp denominator.
        denom = jnp.sum(jnp.exp(jnp.where(keep, logits, neg)),
                        axis=1, keepdims=True)
        log_prob = logits - jnp.log(denom)                      # [TM, NCp]

        if use_codes:
            row_code = row_codes_ref[...]                       # [TM, 1]  int32
            col_code = col_codes_ref[...]                       # [1, NCp] int32
            pos_f = jnp.logical_and(row_code == col_code, keep).astype(jnp.float32)
        else:
            # Dense-mask fallback: tile is already zero in padded rows/cols;
            # apply the self-exclusion (mask * logits_mask in torch).
            pos_f = mask_ref[...] * not_diag.astype(jnp.float32)

        pos_cnt = jnp.sum(pos_f, axis=1, keepdims=True)
        pos_cnt = jnp.where(pos_cnt < 1e-6, 1.0, pos_cnt)
        mean_log_prob_pos = (jnp.sum(pos_f * log_prob, axis=1, keepdims=True)
                             * pl.reciprocal(pos_cnt, approx=True))   # [TM, 1]

        row_valid = (step * tm
                     + lax.broadcasted_iota(jnp.int32, (tm, 1), 0)) < n_anchor
        loss_rows = jnp.where(row_valid, loss_scale * mean_log_prob_pos, 0.0)
        acc_ref[...] += jnp.sum(loss_rows, keepdims=True)

        @pl.when(step == pl.num_programs(0) - 1)
        def _finalize():
            out_ref[...] = acc_ref[...] * jnp.float32(inv_n_anchor)

    return kernel


def supcon_loss(features, labels=None, mask=None, *,
                temperature=0.07, contrast_mode='all', base_temperature=0.07,
                block_rows=128, vmem_limit_bytes=None):
    """JAX/Pallas port of SupConLoss.forward for the standard paths.

    Supports labels=None & mask=None (SimCLR), labels given, or a [bsz, bsz]
    mask given, with contrast_mode in {'all', 'one'}.
    """
    # TODO(synk): repeat_flag / mat_ind dedup branch (python-dict loop with
    # boolean row/col compaction => dynamic shapes) and the heads/nei_flag
    # mask-rewrite branch have no clean static Pallas equivalent.
    if features.ndim < 3:
        raise ValueError('`features` needs to be [bsz, n_views, ...]')
    bsz = features.shape[0]
    n_views = features.shape[1]
    features = features.reshape(bsz, n_views, -1)
    dim = features.shape[-1]

    if labels is not None and mask is not None:
        raise ValueError('Cannot define both `labels` and `mask`')

    contrast_count = n_views
    if contrast_mode == 'one':
        anchor_count = 1
    elif contrast_mode == 'all':
        anchor_count = contrast_count
    else:
        raise ValueError('Unknown mode: {}'.format(contrast_mode))

    n_contrast = bsz * contrast_count
    n_anchor = bsz * anchor_count

    # contrast_feature = cat(unbind(features, dim=1), dim=0)  (view-major rows).
    contrast = jnp.transpose(features, (1, 0, 2)).reshape(n_contrast, dim)

    # Padded geometry: D and N_contrast to x128 (lane alignment), anchor rows
    # to the row-tile size (>= multiples of 8 sublanes).
    if block_rows % 8 != 0:
        raise ValueError('block_rows must be a multiple of 8')
    d_pad = _round_up(dim, 128)
    nc_pad = _round_up(n_contrast, 128)
    tm = min(block_rows, _round_up(n_anchor, 8))
    n_anchor_pad = _round_up(n_anchor, tm)
    grid = (n_anchor_pad // tm,)

    # Single bf16 feature operand; anchor rows are a prefix of contrast rows
    # (all of them in 'all' mode, the first bsz in 'one' mode).
    contrast_bf16 = jnp.pad(contrast.astype(jnp.bfloat16),
                            ((0, nc_pad - n_contrast), (0, d_pad - dim)))

    use_codes = mask is None
    if use_codes:
        if labels is None:
            codes = jnp.arange(bsz, dtype=jnp.int32)            # SimCLR: self-pairs
        else:
            labels = jnp.asarray(labels).reshape(-1)
            if labels.shape[0] != bsz:
                raise ValueError('Num of labels does not match num of features')
            codes = labels.astype(jnp.int32)
        codes_c = jnp.tile(codes, contrast_count)               # [n_contrast]
        col_codes = jnp.pad(codes_c, (0, nc_pad - n_contrast),
                            constant_values=-1).reshape(1, nc_pad)
        row_codes = jnp.pad(codes_c[:n_anchor], (0, n_anchor_pad - n_anchor),
                            constant_values=-1).reshape(n_anchor_pad, 1)
        mask_inputs = (row_codes, col_codes)
        mask_specs = [
            pl.BlockSpec((tm, 1), lambda i: (i, 0)),            # anchor-row codes
            pl.BlockSpec((1, nc_pad), lambda i: (0, 0)),        # contrast codes
        ]
    else:
        base_mask = jnp.asarray(mask, dtype=jnp.float32)
        full_mask = jnp.tile(base_mask, (anchor_count, contrast_count))
        full_mask = jnp.pad(full_mask, ((0, n_anchor_pad - n_anchor),
                                        (0, nc_pad - n_contrast)))
        mask_inputs = (full_mask,)
        mask_specs = [pl.BlockSpec((tm, nc_pad), lambda i: (i, 0))]

    kernel = _make_supcon_kernel(temperature=float(temperature),
                                 base_temperature=float(base_temperature),
                                 n_anchor=n_anchor, n_contrast=n_contrast,
                                 tm=tm, nc_pad=nc_pad, use_codes=use_codes)

    cp_kwargs = dict(dimension_semantics=("arbitrary",))   # reduction over row tiles
    if vmem_limit_bytes is not None:
        cp_kwargs["vmem_limit_bytes"] = int(vmem_limit_bytes)

    out = pl.pallas_call(
        kernel,
        out_shape=jax.ShapeDtypeStruct((1, 1), jnp.float32),
        grid=grid,
        in_specs=list(mask_specs) + [
            pl.BlockSpec((nc_pad, d_pad), lambda i: (0, 0)),    # resident contrast
        ],
        out_specs=pl.BlockSpec((1, 1), lambda i: (0, 0)),
        scratch_shapes=[pltpu.VMEM((1, 1), jnp.float32)],
        compiler_params=pltpu.CompilerParams(**cp_kwargs),
    )(*mask_inputs, contrast_bf16)
    return out[0, 0]


def _supcon_loss_ref(features, labels=None, mask=None, *,
                     temperature=0.07, contrast_mode='all',
                     base_temperature=0.07, matmul_dtype=jnp.float32):
    """Plain-JAX reference mirroring the torch forward."""
    bsz, n_views = features.shape[0], features.shape[1]
    feats = features.reshape(bsz, n_views, -1).astype(jnp.float32)
    dim = feats.shape[-1]
    contrast = jnp.transpose(feats, (1, 0, 2)).reshape(n_views * bsz, dim)
    if contrast_mode == 'one':
        anchor = feats[:, 0]
        anchor_count = 1
    else:
        anchor = contrast
        anchor_count = n_views
    if labels is None and mask is None:
        base = jnp.eye(bsz, dtype=jnp.float32)
    elif labels is not None:
        lab = jnp.asarray(labels).reshape(-1, 1)
        base = (lab == lab.T).astype(jnp.float32)
    else:
        base = jnp.asarray(mask, dtype=jnp.float32)
    m = jnp.tile(base, (anchor_count, n_views))
    na = anchor.shape[0]
    lmask = jnp.ones_like(m).at[jnp.arange(na), jnp.arange(na)].set(0.0)
    m = m * lmask
    adc = jnp.dot(anchor.astype(matmul_dtype), contrast.astype(matmul_dtype).T,
                  preferred_element_type=jnp.float32) / temperature
    logits = adc - jnp.max(adc, axis=1, keepdims=True)
    exp_logits = jnp.exp(logits) * lmask
    log_prob = logits - jnp.log(exp_logits.sum(1, keepdims=True))
    pos = m.sum(1)
    pos = jnp.where(pos < 1e-6, 1.0, pos)
    mlpp = (m * log_prob).sum(1) / pos
    return jnp.mean(-(temperature / base_temperature) * mlpp)


if __name__ == "__main__":
    key = jax.random.PRNGKey(0)
    k1, k2, k3 = jax.random.split(key, 3)

    bsz, n_views, dim = 8, 2, 32
    features = jax.random.normal(k1, (bsz, n_views, dim), dtype=jnp.float32)
    features = features / jnp.linalg.norm(features, axis=-1, keepdims=True)
    labels = jax.random.randint(k2, (bsz,), 0, 3)

    def check(name, got, want_bf16, want_f32):
        got = np.asarray(got)
        # Tight check against a reference using the same bf16-input matmul.
        np.testing.assert_allclose(got, np.asarray(want_bf16),
                                   rtol=2e-2, atol=2e-2, err_msg=name)
        # Loose end-to-end check against the full-f32 reference.
        np.testing.assert_allclose(got, np.asarray(want_f32),
                                   rtol=5e-2, atol=5e-2, err_msg=name)

    explicit_mask = (labels[:, None] == labels[None, :]).astype(jnp.float32)
    cases = [
        ("simclr_all", None, None, 'all'),
        ("labels_all", labels, None, 'all'),
        ("labels_one", labels, None, 'one'),
        ("explicit_mask_all", None, explicit_mask, 'all'),
    ]
    for name, lab, msk, mode in cases:
        got = supcon_loss(features, labels=lab, mask=msk, contrast_mode=mode)
        jax.block_until_ready(got)
        want_bf16 = _supcon_loss_ref(features, labels=lab, mask=msk,
                                     contrast_mode=mode, matmul_dtype=jnp.bfloat16)
        want_f32 = _supcon_loss_ref(features, labels=lab, mask=msk,
                                    contrast_mode=mode)
        check(name, got, want_bf16, want_f32)

    # Multi-tile grid case (row tiling, padding and accumulation exercised).
    bsz2 = 80   # n_anchor = 160 > 128 => grid of 2 row tiles
    f2 = jax.random.normal(k3, (bsz2, n_views, dim), dtype=jnp.float32)
    f2 = f2 / jnp.linalg.norm(f2, axis=-1, keepdims=True)
    l2 = jax.random.randint(k2, (bsz2,), 0, 5)
    got2 = supcon_loss(f2, labels=l2)
    jax.block_until_ready(got2)
    check("multi_tile",
          got2,
          _supcon_loss_ref(f2, labels=l2, matmul_dtype=jnp.bfloat16),
          _supcon_loss_ref(f2, labels=l2))

    print("KERNEL_OK")
</pallas_src>

<mosaic_0001>
module attributes {stable_mosaic.version = 11 : i64} {
  func.func @kernel(%arg0: i32, %arg1: memref<16x1xi32, #tpu.memory_space<vmem>>, %arg2: memref<1x128xi32, #tpu.memory_space<vmem>>, %arg3: memref<128x128xbf16, #tpu.memory_space<vmem>>, %arg4: memref<1x1xf32, #tpu.memory_space<vmem>>, %arg5: memref<1x1xf32, #tpu.memory_space<vmem>>) attributes {dimension_semantics = [#tpu.dimension_semantics<arbitrary>], iteration_bounds = array<i64: 1>, scalar_prefetch = 0 : i64, scratch_operands = 1 : i64, tpu.core_type = #tpu.core_type<tc>, window_params = [{transform_indices = @transform_0, window_bounds = array<i64: 16, 1>}, {pipeline_mode = #tpu.pipeline_mode<synchronous>, transform_indices = @transform_1, window_bounds = array<i64: 1, 128>}, {pipeline_mode = #tpu.pipeline_mode<synchronous>, transform_indices = @transform_2, window_bounds = array<i64: 128, 128>}, {pipeline_mode = #tpu.pipeline_mode<synchronous>, transform_indices = @transform_3, window_bounds = array<i64: 1, 1>}]} {
    %c0_i32 = arith.constant 0 : i32
    %0 = arith.cmpi eq, %arg0, %c0_i32 : i32
    %1 = arith.extui %0 : i1 to i32
    %c0_i32_0 = arith.constant 0 : i32
    %2 = arith.cmpi ne, %1, %c0_i32_0 : i32
    scf.if %2 {
      %cst_29 = arith.constant 0.000000e+00 : f32
      %74 = vector.broadcast %cst_29 : f32 to vector<1x1xf32>
      %c0_30 = arith.constant 0 : index
      %c0_31 = arith.constant 0 : index
      %75 = vector.load %arg5[%c0_30, %c0_31] : memref<1x1xf32, #tpu.memory_space<vmem>>, vector<1x1xf32>
      tpu.vector_store %arg5[%c0_30, %c0_31], %74 {strides = array<i32>} : memref<1x1xf32, #tpu.memory_space<vmem>>, vector<1x1xf32>,
    } else {
    }
    %c16_i32 = arith.constant 16 : i32
    %3 = arith.muli %arg0, %c16_i32 : i32
    %4 = tpu.assume_multiple %3, 16 : i32
    %c0 = arith.constant 0 : index
    %c0_1 = arith.constant 0 : index
    %5 = vector.load %arg3[%c0, %c0_1] : memref<128x128xbf16, #tpu.memory_space<vmem>>, vector<128x128xbf16>
    %6 = arith.index_cast %4 : i32 to index
    %c0_2 = arith.constant 0 : index
    %7 = vector.load %arg3[%6, %c0_2] : memref<128x128xbf16, #tpu.memory_space<vmem>>, vector<16x128xbf16>
    %cst = arith.constant dense<0.000000e+00> : vector<16x128xf32>
    %8 = tpu.matmul %7, %5, %cst {dimension_numbers = #tpu.dot_dimension_numbers<[1], [1], [0], [0], [0, 0, 1, 0], [], []>} : vector<16x128xbf16>, vector<128x128xbf16>, vector<16x128xf32> -> vector<16x128xf32>
    %cst_3 = arith.constant 14.2857141 : f32
    %9 = vector.broadcast %cst_3 : f32 to vector<16x128xf32>
    %10 = arith.mulf %8, %9 : vector<16x128xf32>
    %11 = tpu.iota {dimensions = array<i32: 1>} : vector<16x128xi32>
    %c16_i32_4 = arith.constant 16 : i32
    %12 = arith.muli %arg0, %c16_i32_4 : i32
    %13 = tpu.iota {dimensions = array<i32: 0>} : vector<16x128xi32>
    %14 = vector.broadcast %12 : i32 to vector<16x128xi32>
    %15 = arith.addi %14, %13 : vector<16x128xi32>
    %c16_i32_5 = arith.constant 16 : i32
    %16 = vector.broadcast %c16_i32_5 : i32 to vector<16x128xi32>
    %17 = arith.cmpi slt, %11, %16 : vector<16x128xi32>
    %18 = arith.cmpi ne, %15, %11 : vector<16x128xi32>
    %19 = arith.andi %17, %18 : vector<16x128xi1>
    %cst_6 = arith.constant -1.000000e+30 : f32
    %20 = vector.broadcast %cst_6 : f32 to vector<16x128xf32>
    %21 = arith.select %17, %10, %20 : vector<16x128xi1>, vector<16x128xf32>
    %cst_7 = arith.constant dense<0xFF800000> : vector<16xf32>
    %22 = vector.multi_reduction <maximumf>, %21, %cst_7 [1] : vector<16x128xf32> to vector<16xf32>
    %23 = vector.shape_cast %22 : vector<16xf32> to vector<16x1xf32>
    %24 = vector.broadcast %23 : vector<16x1xf32> to vector<16x128xf32>
    %25 = arith.subf %21, %24 : vector<16x128xf32>
    %cst_8 = arith.constant -1.000000e+30 : f32
    %26 = vector.broadcast %cst_8 : f32 to vector<16x128xf32>
    %27 = arith.select %19, %25, %26 : vector<16x128xi1>, vector<16x128xf32>
    %28 = math.exp %27 : vector<16x128xf32>
    %cst_9 = arith.constant dense<0.000000e+00> : vector<16xf32>
    %29 = vector.multi_reduction <add>, %28, %cst_9 [1] : vector<16x128xf32> to vector<16xf32>
    %30 = vector.shape_cast %29 : vector<16xf32> to vector<16x1xf32>
    %31 = math.log %30 : vector<16x1xf32>
    %32 = vector.broadcast %31 : vector<16x1xf32> to vector<16x128xf32>
    %33 = arith.subf %25, %32 : vector<16x128xf32>
    %c0_10 = arith.constant 0 : index
    %c0_11 = arith.constant 0 : index
    %34 = vector.load %arg1[%c0_10, %c0_11] : memref<16x1xi32, #tpu.memory_space<vmem>>, vector<16x1xi32>
    %c0_12 = arith.constant 0 : index
    %c0_13 = arith.constant 0 : index
    %35 = vector.load %arg2[%c0_12, %c0_13] : memref<1x128xi32, #tpu.memory_space<vmem>>, vector<1x128xi32>
    %36 = vector.broadcast %34 : vector<16x1xi32> to vector<16x128xi32>
    %37 = vector.broadcast %35 : vector<1x128xi32> to vector<16x128xi32>
    %38 = arith.cmpi eq, %36, %37 : vector<16x128xi32>
    %39 = arith.andi %38, %19 : vector<16x128xi1>
    %40 = arith.extui %39 : vector<16x128xi1> to vector<16x128xi32>
    %41 = arith.sitofp %40 : vector<16x128xi32> to vector<16x128xf32>
    %cst_14 = arith.constant dense<0.000000e+00> : vector<16xf32>
    %42 = vector.multi_reduction <add>, %41, %cst_14 [1] : vector<16x128xf32> to vector<16xf32>
    %43 = vector.shape_cast %42 : vector<16xf32> to vector<16x1xf32>
    %cst_15 = arith.constant 9.99999997E-7 : f32
    %44 = vector.broadcast %cst_15 : f32 to vector<16x1xf32>
    %45 = arith.cmpf olt, %43, %44 : vector<16x1xf32>
    %cst_16 = arith.constant 1.000000e+00 : f32
    %46 = vector.broadcast %cst_16 : f32 to vector<16x1xf32>
    %47 = arith.select %45, %46, %43 : vector<16x1xi1>, vector<16x1xf32>
    %48 = arith.mulf %41, %33 : vector<16x128xf32>
    %cst_17 = arith.constant dense<0.000000e+00> : vector<16xf32>
    %49 = vector.multi_reduction <add>, %48, %cst_17 [1] : vector<16x128xf32> to vector<16xf32>
    %50 = vector.shape_cast %49 : vector<16xf32> to vector<16x1xf32>
    %51 = tpu.reciprocal %47 {approx = true} : vector<16x1xf32> -> vector<16x1xf32>
    %52 = arith.mulf %50, %51 : vector<16x1xf32>
    %c16_i32_18 = arith.constant 16 : i32
    %53 = arith.muli %arg0, %c16_i32_18 : i32
    %54 = tpu.iota {dimensions = array<i32: 0>} : vector<16x1xi32>
    %55 = vector.broadcast %53 : i32 to vector<16x1xi32>
    %56 = arith.addi %55, %54 : vector<16x1xi32>
    %c16_i32_19 = arith.constant 16 : i32
    %57 = vector.broadcast %c16_i32_19 : i32 to vector<16x1xi32>
    %58 = arith.cmpi slt, %56, %57 : vector<16x1xi32>
    %cst_20 = arith.constant -1.000000e+00 : f32
    %59 = vector.broadcast %cst_20 : f32 to vector<16x1xf32>
    %60 = arith.mulf %59, %52 : vector<16x1xf32>
    %cst_21 = arith.constant 0.000000e+00 : f32
    %61 = vector.broadcast %cst_21 : f32 to vector<16x1xf32>
    %62 = arith.select %58, %60, %61 : vector<16x1xi1>, vector<16x1xf32>
    %c0_22 = arith.constant 0 : index
    %c0_23 = arith.constant 0 : index
    %63 = vector.load %arg5[%c0_22, %c0_23] : memref<1x1xf32, #tpu.memory_space<vmem>>, vector<1x1xf32>
    %64 = vector.shape_cast %62 : vector<16x1xf32> to vector<1x16x1xf32>
    %cst_24 = arith.constant dense<0.000000e+00> : vector<1xf32>
    %65 = vector.multi_reduction <add>, %64, %cst_24 [1, 2] : vector<1x16x1xf32> to vector<1xf32>
    %66 = vector.shape_cast %65 : vector<1xf32> to vector<1x1x1xf32>
    %67 = vector.extract %66[0, 0, 0] : f32 from vector<1x1x1xf32>
    %68 = vector.broadcast %67 : f32 to vector<1x1xf32>
    %69 = arith.addf %63, %68 : vector<1x1xf32>
    %c0_25 = arith.constant 0 : index
    %c0_26 = arith.constant 0 : index
    %70 = vector.load %arg5[%c0_25, %c0_26] : memref<1x1xf32, #tpu.memory_space<vmem>>, vector<1x1xf32>
    tpu.vector_store %arg5[%c0_25, %c0_26], %69 {strides = array<i32>} : memref<1x1xf32, #tpu.memory_space<vmem>>, vector<1x1xf32>,
    %c0_i32_27 = arith.constant 0 : i32
    %71 = arith.cmpi eq, %arg0, %c0_i32_27 : i32
    %72 = arith.extui %71 : i1 to i32
    %c0_i32_28 = arith.constant 0 : i32
    %73 = arith.cmpi ne, %72, %c0_i32_28 : i32
    scf.if %73 {
      %c0_29 = arith.constant 0 : index
      %c0_30 = arith.constant 0 : index
      %74 = vector.load %arg5[%c0_29, %c0_30] : memref<1x1xf32, #tpu.memory_space<vmem>>, vector<1x1xf32>
      %cst_31 = arith.constant 6.250000e-02 : f32
      %75 = vector.broadcast %cst_31 : f32 to vector<1x1xf32>
      %76 = arith.mulf %74, %75 : vector<1x1xf32>
      %c0_32 = arith.constant 0 : index
      %c0_33 = arith.constant 0 : index
      %77 = vector.load %arg4[%c0_32, %c0_33] : memref<1x1xf32, #tpu.memory_space<vmem>>, vector<1x1xf32>
      tpu.vector_store %arg4[%c0_32, %c0_33], %76 {strides = array<i32>} : memref<1x1xf32, #tpu.memory_space<vmem>>, vector<1x1xf32>,
    } else {
    }
    return
  }
  func.func @transform_0(%arg0: i32) -> (i32, i32) {
    %c0_i32 = arith.constant 0 : i32
    %c0_i32_0 = arith.constant 0 : i32
    return %arg0, %c0_i32 : i32, i32
  }
  func.func @transform_1(%arg0: i32) -> (i32, i32) {
    %c0_i32 = arith.constant 0 : i32
    %c0_i32_0 = arith.constant 0 : i32
    %c0_i32_1 = arith.constant 0 : i32
    return %c0_i32, %c0_i32_0 : i32, i32
  }
  func.func @transform_2(%arg0: i32) -> (i32, i32) {
    %c0_i32 = arith.constant 0 : i32
    %c0_i32_0 = arith.constant 0 : i32
    %c0_i32_1 = arith.constant 0 : i32
    return %c0_i32, %c0_i32_0 : i32, i32
  }
  func.func @transform_3(%arg0: i32) -> (i32, i32) {
    %c0_i32 = arith.constant 0 : i32
    %c0_i32_0 = arith.constant 0 : i32
    %c0_i32_1 = arith.constant 0 : i32
    return %c0_i32, %c0_i32_0 : i32, i32
  }
}

</mosaic_0001>

<llo_original>
// kernel: tpu_custom_call.1
$region0: #{tpu_custom_call.1}
  #allocation0 [shape = 'u32[]', space=smem, size = 0x4, offset = 0x4, fixed_abs, tag = 'smem constant byte address 0x4 - core index']
  #allocation1 [shape = 'u32[144,128]{1,0:T(1,128)}', space=vmem, size = 0x12000, scoped, tag = 'internal scratch']
  #allocation2 [shape = 'f32[1,1]{1,0:T(1,128)}', space=vmem, size = 0x200, scoped, tag = 'scratch operand']
  %s0 = inlined_call_operand.vmem [shape: s32[16,1], index: 0, kind: input, shape index: {}]
  %s1 = inlined_call_operand.vmem [shape: s32[1,128], index: 1, kind: input, shape index: {}]
  %s2 = inlined_call_operand.hbm [shape: bf16[128,128], index: 2, kind: input, shape index: {}]
  %s3 = inlined_call_operand.hbm [shape: f32[1,1], index: 3, kind: output, shape index: {}]
  %s4 = sld [smem:[#allocation0]]
  $region34: #{tpu_custom_call.1} parent=0
    _
  %s6 = ssub.s32 1, %s4
  %s7 = scalar_select 0, %s6, %s4
  $region1: #{tpu_custom_call.1} parent=0
    #allocation3 [shape = 'u8[32768]{0}', space=vmem, size = 0x8000, scoped, tag = 'input window, operand 2, single buffered']
    #allocation4 [shape = 's32[1]{0}', space=sflag, size = 0x4, scoped, tag = 'scoped memory for tpu_custom_call.1']
    #allocation5 [shape = 's32[1]{0}', space=sflag, size = 0x4, scoped, tag = 'scoped memory for tpu_custom_call.1']
    #allocation6 [shape = 'u8[512]{0}', space=vmem, size = 0x400, scoped, tag = 'output window, operand 0, single buffered']
    %8 = vsyncpa [#allocation4], 0
    %9 = vsyncpa [#allocation5], 0
    // Predicated region
    $region2: #{tpu_custom_call.1} parent=1 // pred_check
      _
    $region3: #{tpu_custom_call.1} parent=1 // pred_check_branch
      %11 = sbr.rel (0) target = $region5
    $region4: #{tpu_custom_call.1} parent=1 // pred_region
      _
    $region5: #{tpu_custom_call.1} parent=1 // pred_fallthru
      _
    // Predicated region
    $region6: #{tpu_custom_call.1} parent=1 // pred_check
      _
    $region7: #{tpu_custom_call.1} parent=1 // pred_check_branch
      %13 = sbr.rel (0) target = $region9
    $region8: #{tpu_custom_call.1} parent=1 // pred_region
      _
    $region9: #{tpu_custom_call.1} parent=1 // pred_fallthru
      _
    // Predicated region
    $region10: #{tpu_custom_call.1} parent=1 // pred_check
      _
    $region11: #{tpu_custom_call.1} parent=1 // pred_check_branch
      %15 = sbr.rel (0) target = $region13
    $region12: #{tpu_custom_call.1} parent=1 // pred_region
      %s17 = ssub.s32 1024, 1024
      %18 = vsyncadd [#allocation4], %s17
      %s19 = sshll.u32 [#allocation3], 4
      %s20 = int_to_ptr.vmem [resolvable:$true] %s19
      %25 = dma.hbm_to_vmem [thread:$0]  %s2, 1024, %s20, [#allocation4], 64, 64, 4
    $region13: #{tpu_custom_call.1} parent=1 // pred_fallthru
      _
    // Predicated region
    $region14: #{tpu_custom_call.1} parent=1 // pred_check
      _
    $region15: #{tpu_custom_call.1} parent=1 // pred_check_branch
      %27 = sbr.rel (0) target = $region17
    $region16: #{tpu_custom_call.1} parent=1 // pred_region
      %28 = dma.done [#allocation4], 1024
    $region17: #{tpu_custom_call.1} parent=1 // pred_fallthru
      _
    %p30 = scmp.eq.s32.totalorder 0, 0
    // Predicated region
    $region18: #{tpu_custom_call.1} parent=1 // pred_check
      %p31 = pneg %p30
    $region19: #{tpu_custom_call.1} parent=1 // pred_check_branch
      %33 = sbr.rel (%p31) target = $region21
    $region20: #{tpu_custom_call.1} parent=1 // pred_region
      %vm34 = vcmask 0
      %35 = vst.msk [vmem:[#allocation2] sm:$0x1] %vm34, 0.0
    $region21: #{tpu_custom_call.1} parent=1 // pred_fallthru
      _
    %s36 = smul.u32 0, 16
    %v37 = vld [vmem:[#allocation3] sm:$0xf]
    %v38 = vld [vmem:[#allocation3 + $0x4] sm:$0xf]
    %v39 = vld [vmem:[#allocation3 + $0x8] sm:$0xf]
    %v40 = vld [vmem:[#allocation3 + $0xc] sm:$0xf]
    %v41 = vld [vmem:[#allocation3 + $0x10] sm:$0xf]
    %v42 = vld [vmem:[#allocation3 + $0x14] sm:$0xf]
    %v43 = vld [vmem:[#allocation3 + $0x18] sm:$0xf]
    %v44 = vld [vmem:[#allocation3 + $0x1c] sm:$0xf]
    %v45 = vld [vmem:[#allocation3 + $0x20] sm:$0xf]
    %v46 = vld [vmem:[#allocation3 + $0x24] sm:$0xf]
    %v47 = vld [vmem:[#allocation3 + $0x28] sm:$0xf]
    %v48 = vld [vmem:[#allocation3 + $0x2c] sm:$0xf]
    %v49 = vld [vmem:[#allocation3 + $0x30] sm:$0xf]
    %v50 = vld [vmem:[#allocation3 + $0x34] sm:$0xf]
    %v51 = vld [vmem:[#allocation3 + $0x38] sm:$0xf]
    %v52 = vld [vmem:[#allocation3 + $0x3c] sm:$0xf]
    %s53 = sshra.s32 %s36, 3
    %s54 = sand.u32 %s36, 7
    %s55 = smul.addr %s53, 4
    %s56 = scalar_lea.vmem [#allocation3], %s55
    %v57 = vld [vmem:[%s56] sm:$0xf]
    %v58 = vld [vmem:[%s56 + $0x4] sm:$0xf]
    %v61 = vunpack.c.l.b16 %v57
    %v62 = vunpack.c.l.b16 %v58
    %v63 = vpack.c.b16 %v62, %v61
    %v81 = vunpack.c.l.b16 %v37
    %v82 = vunpack.c.l.b16 %v38
    %v83 = vunpack.c.l.b16 %v39
    %v84 = vunpack.c.l.b16 %v40
    %v85 = vunpack.c.l.b16 %v41
    %v86 = vunpack.c.l.b16 %v42
    %v87 = vunpack.c.l.b16 %v43
    %v88 = vunpack.c.l.b16 %v44
    %v89 = vunpack.c.l.b16 %v45
    %v90 = vunpack.c.l.b16 %v46
    %v91 = vunpack.c.l.b16 %v47
    %v92 = vunpack.c.l.b16 %v48
    %v93 = vunpack.c.l.b16 %v49
    %v94 = vunpack.c.l.b16 %v50
    %v95 = vunpack.c.l.b16 %v51
    %v96 = vunpack.c.l.b16 %v52
    %v97 = vpack.c.b16 %v82, %v81
    %v98 = vpack.c.b16 %v84, %v83
    %v99 = vpack.c.b16 %v86, %v85
    %v100 = vpack.c.b16 %v88, %v87
    %v101 = vpack.c.b16 %v90, %v89
    %v102 = vpack.c.b16 %v92, %v91
    %v103 = vpack.c.b16 %v94, %v93
    %v104 = vpack.c.b16 %v96, %v95
    %113 = vmatprep.subr.bf16.mxu0 0
    %114 = vmatpush1.bf16.xpose.msra.mxu0 %v104
    %115 = vmatprep.subr.bf16.mxu0 0
    %116 = vmatpush1.bf16.xpose.msra.mxu0 %v103
    %117 = vmatprep.subr.bf16.mxu0 0
    %118 = vmatpush1.bf16.xpose.msra.mxu0 %v102
    %119 = vmatprep.subr.bf16.mxu0 0
    %120 = vmatpush1.bf16.xpose.msra.mxu0 %v101
    %121 = vmatprep.subr.bf16.mxu0 0
    %122 = vmatpush1.bf16.xpose.msra.mxu0 %v100
    %123 = vmatprep.subr.bf16.mxu0 0
    %124 = vmatpush1.bf16.xpose.msra.mxu0 %v99
    %125 = vmatprep.subr.bf16.mxu0 0
    %126 = vmatpush1.bf16.xpose.msra.mxu0 %v98
    %127 = vmatprep.subr.bf16.mxu0 0
    %128 = vmatpush1.bf16.xpose.msra.mxu0 %v97
    %129 = vmatprep.subr.bf16.mxu0 0
    %130 = vmatpush2.bf16.xpose.msra.mxu0 0
    %131 = vmatprep.subr.bf16.mxu0 0
    %132 = vmatpush2.bf16.xpose.msra.mxu0 0
    %133 = vmatprep.subr.bf16.mxu0 0
    %134 = vmatpush2.bf16.xpose.msra.mxu0 0
    %135 = vmatprep.subr.bf16.mxu0 0
    %136 = vmatpush2.bf16.xpose.msra.mxu0 0
    %137 = vmatprep.subr.bf16.mxu0 0
    %138 = vmatpush2.bf16.xpose.msra.mxu0 0
    %139 = vmatprep.subr.bf16.mxu0 0
    %140 = vmatpush2.bf16.xpose.msra.mxu0 0
    %141 = vmatprep.subr.bf16.mxu0 0
    %142 = vmatpush2.bf16.xpose.msra.mxu0 0
    %143 = vmatprep.subr.bf16.mxu0 0
    %144 = vmatpush2.bf16.xpose.msra.mxu0 0
    %145 = vmatprep.mubr.bf16.mxu0 0
    %146 = vmatmul.mubr.bf16.gmra.mxu0 %v63
    %v147 = vpop.f32.mrf.mxu0
    %v148 = vadd.f32 0.0, %v147
    %v149 = vpop.f32.mrf.mxu0
    %v150 = vpop.f32.mrf.mxu0
    %v151 = vadd.f32 0.0, %v150
    %v152 = vpop.f32.mrf.mxu0
    %153 = vdwg.mxu0
    %v154 = vmul.f32 %v148, 14.285714
    %v155 = vmul.f32 %v151, 14.285714
    %v156 = vlaneseq
    %v157 = vand.u32 %v156, 127
    %v158 = vlaneseq
    %v159 = vshrl.u32 %v158, 7
    %v160 = vadd.s32 %v159, 8
    %v161 = vstv %s36
    %v162 = vadd.s32 %v161, %v159
    %v163 = vadd.s32 %v161, %v160
    %vm164 = vcmp.lt.s32.totalorder %v157, 16
    %vm165 = vcmp.ne.s32.totalorder %v162, %v157
    %vm166 = vcmp.ne.s32.totalorder %v163, %v157
    %vm167 = vmand %vm164, %vm165
    %vm168 = vmand %vm164, %vm166
    %v169 = vsel %vm164, %v154, -1e+30
    %v170 = vsel %vm164, %v155, -1e+30
    %171 = vmax.xlane.f32.xlu0 %v169
    %v172 = vpop.xlane.xlu0 %171
    %173 = vmax.xlane.f32.xlu0 %v170
    %v174 = vpop.xlane.xlu0 %173
    %v175 = vsub.f32 %v169, %v172
    %v176 = vsub.f32 %v170, %v174
    %v177 = vsel %vm167, %v175, -1e+30
    %v178 = vsel %vm168, %v176, -1e+30
    %v179 = vmul.f32 %v177, 1.442695
    %v180 = vpow.pop %v179
    %v181 = vmul.f32 %v178, 1.442695
    %v182 = vpow.pop %v181
    %183 = vadd.xlane.f32.xlu0 %v180
    %v184 = vpop.xlane.xlu0 %183
    %185 = vadd.xlane.f32.xlu0 %v182
    %v186 = vpop.xlane.xlu0 %185
    %v187 = vlog2.pop %v184
    %v188 = vmul.f32 %v187, 0.6931472
    %v189 = vlog2.pop %v186
    %v190 = vmul.f32 %v189, 0.6931472
    %v191 = vsub.f32 %v175, %v188
    %v192 = vsub.f32 %v176, %v190
    %v193 = vld [vmem:[%s0] sm:$0xff]
    %v194 = vld [vmem:[%s0 + $0x8] sm:$0xff]
    %v195 = vld [vmem:[%s1] sm:$0x1]
    %196 = vset.pattern.permute.xlu0 0
    %197 = vperm.xlu0 %196, %v193
    %v198 = vpop.permute.xlu0 %197
    %199 = vset.pattern.permute.xlu0 0
    %200 = vperm.xlu0 %199, %v194
    %v201 = vpop.permute.xlu0 %200
    %v202 = vlaneseq
    %v203 = vshrl.u32 %v202, 7
    %v204 = vsub.s32 0, %v203
    %v205 = vrot.slane %v195, %v204
    %vm206 = vcmp.eq.s32.totalorder %v198, %v205
    %vm207 = vcmp.eq.s32.totalorder %v201, %v205
    %vm208 = vmand %vm206, %vm167
    %vm209 = vmand %vm207, %vm168
    %v210 = vsel %vm208, 1, 0
    %v211 = vsel %vm209, 1, 0
    %v212 = vcvt.s32.f32 %v210
    %v213 = vcvt.s32.f32 %v211
    %214 = vadd.xlane.f32.xlu0 %v212
    %v215 = vpop.xlane.xlu0 %214
    %216 = vadd.xlane.f32.xlu0 %v213
    %v217 = vpop.xlane.xlu0 %216
    %vm218 = vcmp.lt.f32.partialorder %v215, 1e-06
    %vm219 = vcmp.lt.f32.partialorder %v217, 1e-06
    %v220 = vsel %vm218, 1.0, %v215
    %v221 = vsel %vm219, 1.0, %v217
    %v222 = vmul.f32 %v212, %v191
    %v223 = vmul.f32 %v213, %v192
    %224 = vadd.xlane.f32.xlu0 %v222
    %v225 = vpop.xlane.xlu0 %224
    %226 = vadd.xlane.f32.xlu0 %v223
    %v227 = vpop.xlane.xlu0 %226
    %v228 = vrcp.pop %v220
    %v229 = vrcp.pop %v221
    %v230 = vmul.f32 %v225, %v228
    %v231 = vmul.f32 %v227, %v229
    %vm232 = vcmp.lt.s32.totalorder %v162, 16
    %vm233 = vcmp.lt.s32.totalorder %v163, 16
    %v234 = vmul.f32 %v230, -1.0
    %v235 = vmul.f32 %v231, -1.0
    %v236 = vsel %vm232, %v234, 0.0
    %v237 = vsel %vm233, %v235, 0.0
    %v238 = vld [vmem:[#allocation2] sm:$0x1]
    %vm239 = vcmask 7168
    %v240 = vsel %vm239, %v236, 0.0
    %v241 = vsel %vm239, %v237, 0.0
    %v242 = vadd.f32 %v240, %v241
    %243 = vadd.xlane.f32.xlu0 %v242
    %v244 = vpop.xlane.xlu0 %243
    %v245 = vrot.slane %v244, 4
    %v246 = vadd.f32 %v244, %v245
    %v247 = vrot.slane %v246, 2
    %v248 = vadd.f32 %v246, %v247
    %v249 = vrot.slane %v248, 1
    %v250 = vadd.f32 %v248, %v249
    %s251 = vtos %v250
    %v252 = vstv %s251
    %v253 = vadd.f32 %v238, %v252
    %vm254 = vcmask 0
    %255 = vst.msk [vmem:[#allocation2] sm:$0x1] %vm254, %v253
    // Predicated region
    $region22: #{tpu_custom_call.1} parent=1 // pred_check
      %p256 = pneg %p30
    $region23: #{tpu_custom_call.1} parent=1 // pred_check_branch
      %258 = sbr.rel (%p256) target = $region25
    $region24: #{tpu_custom_call.1} parent=1 // pred_region
      %v259 = vld [vmem:[#allocation2] sm:$0x1]
      %v260 = vmul.f32 %v259, 0.0625
      %261 = vst.msk [vmem:[#allocation6] sm:$0x1] %vm254, %v260
    $region25: #{tpu_custom_call.1} parent=1 // pred_fallthru
      _
    // Predicated region
    $region26: #{tpu_custom_call.1} parent=1 // pred_check
      _
    $region27: #{tpu_custom_call.1} parent=1 // pred_check_branch
      %263 = sbr.rel (0) target = $region29
    $region28: #{tpu_custom_call.1} parent=1 // pred_region
      %s265 = ssub.s32 16, 16
      %266 = vsyncadd [#allocation5], %s265
      %s268 = sshll.u32 [#allocation6], 4
      %s269 = int_to_ptr.vmem [resolvable:$true] %s268
      %271 = dma.vmem_to_hbm [thread:$0]  %s269, 16, %s3, [#allocation5]
    $region29: #{tpu_custom_call.1} parent=1 // pred_fallthru
      _
    // Predicated region
    $region30: #{tpu_custom_call.1} parent=1 // pred_check
      _
    $region31: #{tpu_custom_call.1} parent=1 // pred_check_branch
      %273 = sbr.rel (0) target = $region33
    $region32: #{tpu_custom_call.1} parent=1 // pred_region
      %274 = dma.done [#allocation5], 16
    $region33: #{tpu_custom_call.1} parent=1 // pred_fallthru
      _
    %275 = vsyncpa [#allocation4], 1
    %276 = vsyncpa [#allocation5], 1

</llo_original>
